<compile_context>
chip_gen: v7x
topology: tpu7x:2x2x1
jax: 0.10.0
libtpu: 0.0.40
codegen_flags: <defaults>
</compile_context>

<pallas_src>
import functools

import jax
import jax.numpy as jnp
from jax.experimental import pallas as pl
from jax.experimental.pallas import tpu as pltpu

H1, H2, H3 = 256, 128, 64   # encoder widths
D1, D2 = 32, 1              # decoder widths


def _smalldeepset_kernel(x_ref, w1_ref, b1_ref, w2_ref, b2_ref, w3_ref, b3_ref,
                         wd1_ref, bd1_ref, wd2_ref, bd2_ref, out_ref, *, pool):
    BB, N, F = x_ref.shape
    x = x_ref[...].reshape(BB * N, F)                      # flatten bags x instances

    # ---------------- encoder MLP (MXU matmuls on the flattened matrix) ------
    h = jnp.dot(x, w1_ref[...], preferred_element_type=jnp.float32) + b1_ref[...]
    h = jnp.maximum(h, 0.0)                                # (BB*N, 256)
    h = jnp.dot(h.astype(w2_ref.dtype), w2_ref[...],
                preferred_element_type=jnp.float32) + b2_ref[...]
    h = jnp.maximum(h, 0.0)                                # (BB*N, 128)
    h = jnp.dot(h.astype(w3_ref.dtype), w3_ref[...],
                preferred_element_type=jnp.float32) + b3_ref[...]   # (BB*N, 64)

    # ---------------- pool over the set dimension ----------------------------
    h3 = h.reshape(BB, N, H3)
    if pool == 'mean':
        pooled = jnp.mean(h3, axis=1)                      # (BB, 64)
    elif pool == 'sum':
        pooled = jnp.sum(h3, axis=1)
    elif pool == 'max':
        pooled = jnp.max(h3, axis=1)
    elif pool == 'min':
        pooled = jnp.min(h3, axis=1)
    else:
        raise ValueError(f"unsupported pool: {pool}")

    # ---------------- decoder: Linear(64->32)+ReLU, Linear(32->1)+Sigmoid ----
    d = jnp.dot(pooled.astype(wd1_ref.dtype), wd1_ref[...],
                preferred_element_type=jnp.float32) + bd1_ref[...]   # (BB, 32)
    d = jnp.maximum(d, 0.0)
    # width-1 output column: VPU multiply-reduce instead of an MXU matmul
    logit = jnp.sum(d * wd2_ref[...], axis=-1, keepdims=True) + bd2_ref[...]  # (BB, 1)
    prob = jax.nn.sigmoid(logit)                           # (BB, 1)

    out_ref[...] = prob.reshape(1, BB).astype(out_ref.dtype)   # lane-dense row


def smalldeepset_forward(x, params, *, pool='mean', block_bags=128, use_bf16=False):
    """x: (B, N, F) float32. Returns sigmoid output of shape (B, 1)."""
    B, N, F = x.shape
    w1, b1, w2, b2, w3, b3, wd1, bd1, wd2, bd2 = params

    if use_bf16:
        # bf16 inputs / encoder weights, f32 MXU accumulation (v6e/v7x lever).
        x = x.astype(jnp.bfloat16)
        w1 = w1.astype(jnp.bfloat16)
        w2 = w2.astype(jnp.bfloat16)
        w3 = w3.astype(jnp.bfloat16)

    BB = max(1, min(block_bags, B))
    num_blocks = pl.cdiv(B, BB)
    B_pad = num_blocks * BB
    if B_pad != B:
        x = jnp.pad(x, ((0, B_pad - B), (0, 0), (0, 0)))

    def full_spec(arr):
        # whole-array block, same tile for every grid step (fetched once)
        return pl.BlockSpec(arr.shape, lambda b, n=arr.ndim: (0,) * n)

    kernel = functools.partial(_smalldeepset_kernel, pool=pool)

    out = pl.pallas_call(
        kernel,
        out_shape=jax.ShapeDtypeStruct((num_blocks, BB), jnp.float32),
        grid_spec=pltpu.PrefetchScalarGridSpec(
            num_scalar_prefetch=0,
            grid=(num_blocks,),
            in_specs=[
                pl.BlockSpec((BB, N, F), lambda b: (b, 0, 0)),   # block of bags
                full_spec(w1), full_spec(b1),
                full_spec(w2), full_spec(b2),
                full_spec(w3), full_spec(b3),
                full_spec(wd1), full_spec(bd1),
                full_spec(wd2), full_spec(bd2),
            ],
            out_specs=pl.BlockSpec((1, BB), lambda b: (b, 0)),   # lane-dense
        ),
        compiler_params=pltpu.CompilerParams(
            dimension_semantics=("parallel",)),
    )(x, w1, b1, w2, b2, w3, b3, wd1, bd1, wd2, bd2)

    # (num_blocks, BB) row-major == batch order; drop padding, back to (B, 1)
    return out.reshape(B_pad, 1)[:B]


def init_params(key, n_input_features):
    ks = jax.random.split(key, 10)
    s = 0.1
    w1 = jax.random.normal(ks[0], (n_input_features, H1), jnp.float32) * s
    b1 = jax.random.normal(ks[1], (1, H1), jnp.float32) * s
    w2 = jax.random.normal(ks[2], (H1, H2), jnp.float32) * s
    b2 = jax.random.normal(ks[3], (1, H2), jnp.float32) * s
    w3 = jax.random.normal(ks[4], (H2, H3), jnp.float32) * s
    b3 = jax.random.normal(ks[5], (1, H3), jnp.float32) * s
    wd1 = jax.random.normal(ks[6], (H3, D1), jnp.float32) * s
    bd1 = jax.random.normal(ks[7], (1, D1), jnp.float32) * s
    wd2 = jax.random.normal(ks[8], (D2, D1), jnp.float32) * s   # (1, 32) row
    bd2 = jax.random.normal(ks[9], (1, D2), jnp.float32) * s
    return (w1, b1, w2, b2, w3, b3, wd1, bd1, wd2, bd2)


def smalldeepset_reference(x, params, pool='mean'):
    """Plain-JAX reference mirroring the PyTorch forward (pool='mean', reg=False)."""
    w1, b1, w2, b2, w3, b3, wd1, bd1, wd2, bd2 = params
    h = jnp.maximum(x @ w1 + b1, 0.0)
    h = jnp.maximum(h @ w2 + b2, 0.0)
    h = h @ w3 + b3                                        # (B, N, 64)
    if pool == 'mean':
        p = h.mean(axis=1)
    elif pool == 'sum':
        p = h.sum(axis=1)
    elif pool == 'max':
        p = h.max(axis=1)
    elif pool == 'min':
        p = h.min(axis=1)
    else:
        raise ValueError(pool)
    d = jnp.maximum(p @ wd1 + bd1, 0.0)                    # (B, 32)
    logit = d @ wd2.T + bd2                                # (B, 1)
    return jax.nn.sigmoid(logit)


if __name__ == "__main__":
    key = jax.random.PRNGKey(0)
    k_x, k_p = jax.random.split(key)

    B, N, F = 6, 8, 32          # 6 sets, 8 elements per set, 32 input features
    x = jax.random.normal(k_x, (B, N, F), jnp.float32)
    params = init_params(k_p, F)

    y_ref = smalldeepset_reference(x, params)

    # default path: whole batch in one grid step
    y = smalldeepset_forward(x, params)
    jax.block_until_ready(y)
    assert y.shape == (B, 1)
    assert jnp.allclose(y, y_ref, atol=1e-4, rtol=1e-4)

    # multi-block path: 4 bags per grid step -> grid of 2 with batch padding
    y_blk = smalldeepset_forward(x, params, block_bags=4)
    jax.block_until_ready(y_blk)
    assert y_blk.shape == (B, 1)
    assert jnp.allclose(y_blk, y_ref, atol=1e-4, rtol=1e-4)

    print("KERNEL_OK")
</pallas_src>

<mosaic_0001>
module attributes {stable_mosaic.version = 11 : i64} {
  func.func @_smalldeepset_kernel(%arg0: i32, %arg1: memref<6x8x32xf32, #tpu.memory_space<vmem>>, %arg2: memref<32x256xf32, #tpu.memory_space<vmem>>, %arg3: memref<1x256xf32, #tpu.memory_space<vmem>>, %arg4: memref<256x128xf32, #tpu.memory_space<vmem>>, %arg5: memref<1x128xf32, #tpu.memory_space<vmem>>, %arg6: memref<128x64xf32, #tpu.memory_space<vmem>>, %arg7: memref<1x64xf32, #tpu.memory_space<vmem>>, %arg8: memref<64x32xf32, #tpu.memory_space<vmem>>, %arg9: memref<1x32xf32, #tpu.memory_space<vmem>>, %arg10: memref<1x32xf32, #tpu.memory_space<vmem>>, %arg11: memref<1x1xf32, #tpu.memory_space<vmem>>, %arg12: memref<1x6xf32, #tpu.memory_space<vmem>>) attributes {dimension_semantics = [#tpu.dimension_semantics<parallel>], iteration_bounds = array<i64: 1>, scalar_prefetch = 0 : i64, scratch_operands = 0 : i64, tpu.core_type = #tpu.core_type<tc>, window_params = [{transform_indices = @transform_0, window_bounds = array<i64: 6, 8, 32>}, {pipeline_mode = #tpu.pipeline_mode<synchronous>, transform_indices = @transform_1, window_bounds = array<i64: 32, 256>}, {pipeline_mode = #tpu.pipeline_mode<synchronous>, transform_indices = @transform_2, window_bounds = array<i64: 1, 256>}, {pipeline_mode = #tpu.pipeline_mode<synchronous>, transform_indices = @transform_3, window_bounds = array<i64: 256, 128>}, {pipeline_mode = #tpu.pipeline_mode<synchronous>, transform_indices = @transform_4, window_bounds = array<i64: 1, 128>}, {pipeline_mode = #tpu.pipeline_mode<synchronous>, transform_indices = @transform_5, window_bounds = array<i64: 128, 64>}, {pipeline_mode = #tpu.pipeline_mode<synchronous>, transform_indices = @transform_6, window_bounds = array<i64: 1, 64>}, {pipeline_mode = #tpu.pipeline_mode<synchronous>, transform_indices = @transform_7, window_bounds = array<i64: 64, 32>}, {pipeline_mode = #tpu.pipeline_mode<synchronous>, transform_indices = @transform_8, window_bounds = array<i64: 1, 32>}, {pipeline_mode = #tpu.pipeline_mode<synchronous>, transform_indices = @transform_9, window_bounds = array<i64: 1, 32>}, {pipeline_mode = #tpu.pipeline_mode<synchronous>, transform_indices = @transform_10, window_bounds = array<i64: 1, 1>}, {transform_indices = @transform_11, window_bounds = array<i64: 1, 6>}]} {
    %c0 = arith.constant 0 : index
    %c0_0 = arith.constant 0 : index
    %c0_1 = arith.constant 0 : index
    %0 = vector.load %arg1[%c0, %c0_0, %c0_1] : memref<6x8x32xf32, #tpu.memory_space<vmem>>, vector<6x8x32xf32>
    %1 = vector.shape_cast %0 : vector<6x8x32xf32> to vector<48x32xf32>
    %c0_2 = arith.constant 0 : index
    %c0_3 = arith.constant 0 : index
    %2 = vector.load %arg2[%c0_2, %c0_3] : memref<32x256xf32, #tpu.memory_space<vmem>>, vector<32x256xf32>
    %cst = arith.constant dense<0.000000e+00> : vector<48x256xf32>
    %3 = tpu.matmul %1, %2, %cst {dimension_numbers = #tpu.dot_dimension_numbers<[1], [0], [0], [1], [0, 0, 1, 1], [], []>} : vector<48x32xf32>, vector<32x256xf32>, vector<48x256xf32> -> vector<48x256xf32>
    %c0_4 = arith.constant 0 : index
    %c0_5 = arith.constant 0 : index
    %4 = vector.load %arg3[%c0_4, %c0_5] : memref<1x256xf32, #tpu.memory_space<vmem>>, vector<1x256xf32>
    %5 = vector.broadcast %4 : vector<1x256xf32> to vector<48x256xf32>
    %6 = arith.addf %3, %5 : vector<48x256xf32>
    %cst_6 = arith.constant 0.000000e+00 : f32
    %7 = vector.broadcast %cst_6 : f32 to vector<48x256xf32>
    %8 = arith.maximumf %6, %7 : vector<48x256xf32>
    %c0_7 = arith.constant 0 : index
    %c0_8 = arith.constant 0 : index
    %9 = vector.load %arg4[%c0_7, %c0_8] : memref<256x128xf32, #tpu.memory_space<vmem>>, vector<256x128xf32>
    %cst_9 = arith.constant dense<0.000000e+00> : vector<48x128xf32>
    %10 = tpu.matmul %8, %9, %cst_9 {dimension_numbers = #tpu.dot_dimension_numbers<[1], [0], [0], [1], [0, 0, 1, 1], [], []>} : vector<48x256xf32>, vector<256x128xf32>, vector<48x128xf32> -> vector<48x128xf32>
    %c0_10 = arith.constant 0 : index
    %c0_11 = arith.constant 0 : index
    %11 = vector.load %arg5[%c0_10, %c0_11] : memref<1x128xf32, #tpu.memory_space<vmem>>, vector<1x128xf32>
    %12 = vector.broadcast %11 : vector<1x128xf32> to vector<48x128xf32>
    %13 = arith.addf %10, %12 : vector<48x128xf32>
    %cst_12 = arith.constant 0.000000e+00 : f32
    %14 = vector.broadcast %cst_12 : f32 to vector<48x128xf32>
    %15 = arith.maximumf %13, %14 : vector<48x128xf32>
    %c0_13 = arith.constant 0 : index
    %c0_14 = arith.constant 0 : index
    %16 = vector.load %arg6[%c0_13, %c0_14] : memref<128x64xf32, #tpu.memory_space<vmem>>, vector<128x64xf32>
    %cst_15 = arith.constant dense<0.000000e+00> : vector<48x64xf32>
    %17 = tpu.matmul %15, %16, %cst_15 {dimension_numbers = #tpu.dot_dimension_numbers<[1], [0], [0], [1], [0, 0, 1, 1], [], []>} : vector<48x128xf32>, vector<128x64xf32>, vector<48x64xf32> -> vector<48x64xf32>
    %c0_16 = arith.constant 0 : index
    %c0_17 = arith.constant 0 : index
    %18 = vector.load %arg7[%c0_16, %c0_17] : memref<1x64xf32, #tpu.memory_space<vmem>>, vector<1x64xf32>
    %19 = vector.broadcast %18 : vector<1x64xf32> to vector<48x64xf32>
    %20 = arith.addf %17, %19 : vector<48x64xf32>
    %21 = vector.shape_cast %20 : vector<48x64xf32> to vector<6x8x64xf32>
    %cst_18 = arith.constant dense<0.000000e+00> : vector<6x64xf32>
    %22 = vector.multi_reduction <add>, %21, %cst_18 [1] : vector<6x8x64xf32> to vector<6x64xf32>
    %cst_19 = arith.constant 8.000000e+00 : f32
    %23 = vector.broadcast %cst_19 : f32 to vector<6x64xf32>
    %24 = arith.divf %22, %23 : vector<6x64xf32>
    %c0_20 = arith.constant 0 : index
    %c0_21 = arith.constant 0 : index
    %25 = vector.load %arg8[%c0_20, %c0_21] : memref<64x32xf32, #tpu.memory_space<vmem>>, vector<64x32xf32>
    %cst_22 = arith.constant dense<0.000000e+00> : vector<6x32xf32>
    %26 = tpu.matmul %24, %25, %cst_22 {dimension_numbers = #tpu.dot_dimension_numbers<[1], [0], [0], [1], [0, 0, 1, 1], [], []>} : vector<6x64xf32>, vector<64x32xf32>, vector<6x32xf32> -> vector<6x32xf32>
    %c0_23 = arith.constant 0 : index
    %c0_24 = arith.constant 0 : index
    %27 = vector.load %arg9[%c0_23, %c0_24] : memref<1x32xf32, #tpu.memory_space<vmem>>, vector<1x32xf32>
    %28 = vector.broadcast %27 : vector<1x32xf32> to vector<6x32xf32>
    %29 = arith.addf %26, %28 : vector<6x32xf32>
    %cst_25 = arith.constant 0.000000e+00 : f32
    %30 = vector.broadcast %cst_25 : f32 to vector<6x32xf32>
    %31 = arith.maximumf %29, %30 : vector<6x32xf32>
    %c0_26 = arith.constant 0 : index
    %c0_27 = arith.constant 0 : index
    %32 = vector.load %arg10[%c0_26, %c0_27] : memref<1x32xf32, #tpu.memory_space<vmem>>, vector<1x32xf32>
    %33 = vector.broadcast %32 : vector<1x32xf32> to vector<6x32xf32>
    %34 = arith.mulf %31, %33 : vector<6x32xf32>
    %cst_28 = arith.constant dense<0.000000e+00> : vector<6xf32>
    %35 = vector.multi_reduction <add>, %34, %cst_28 [1] : vector<6x32xf32> to vector<6xf32>
    %36 = vector.shape_cast %35 : vector<6xf32> to vector<6x1xf32>
    %c0_29 = arith.constant 0 : index
    %c0_30 = arith.constant 0 : index
    %37 = vector.load %arg11[%c0_29, %c0_30] : memref<1x1xf32, #tpu.memory_space<vmem>>, vector<1x1xf32>
    %38 = vector.broadcast %37 : vector<1x1xf32> to vector<6x1xf32>
    %39 = arith.addf %36, %38 : vector<6x1xf32>
    %40 = arith.negf %39 : vector<6x1xf32>
    %41 = math.exp %40 : vector<6x1xf32>
    %cst_31 = arith.constant 1.000000e+00 : f32
    %42 = vector.broadcast %cst_31 : f32 to vector<6x1xf32>
    %43 = arith.addf %42, %41 : vector<6x1xf32>
    %44 = arith.divf %42, %43 : vector<6x1xf32>
    %45 = vector.shape_cast %44 : vector<6x1xf32> to vector<1x6xf32>
    %c0_32 = arith.constant 0 : index
    %c0_33 = arith.constant 0 : index
    %46 = vector.load %arg12[%c0_32, %c0_33] : memref<1x6xf32, #tpu.memory_space<vmem>>, vector<1x6xf32>
    tpu.vector_store %arg12[%c0_32, %c0_33], %45 {strides = array<i32>} : memref<1x6xf32, #tpu.memory_space<vmem>>, vector<1x6xf32>,
    return
  }
  func.func @transform_0(%arg0: i32) -> (i32, i32, i32) {
    %c0_i32 = arith.constant 0 : i32
    %c0_i32_0 = arith.constant 0 : i32
    %c0_i32_1 = arith.constant 0 : i32
    return %arg0, %c0_i32, %c0_i32_0 : i32, i32, i32
  }
  func.func @transform_1(%arg0: i32) -> (i32, i32) {
    %c0_i32 = arith.constant 0 : i32
    %c0_i32_0 = arith.constant 0 : i32
    %c0_i32_1 = arith.constant 0 : i32
    return %c0_i32, %c0_i32_0 : i32, i32
  }
  func.func @transform_2(%arg0: i32) -> (i32, i32) {
    %c0_i32 = arith.constant 0 : i32
    %c0_i32_0 = arith.constant 0 : i32
    %c0_i32_1 = arith.constant 0 : i32
    return %c0_i32, %c0_i32_0 : i32, i32
  }
  func.func @transform_3(%arg0: i32) -> (i32, i32) {
    %c0_i32 = arith.constant 0 : i32
    %c0_i32_0 = arith.constant 0 : i32
    %c0_i32_1 = arith.constant 0 : i32
    return %c0_i32, %c0_i32_0 : i32, i32
  }
  func.func @transform_4(%arg0: i32) -> (i32, i32) {
    %c0_i32 = arith.constant 0 : i32
    %c0_i32_0 = arith.constant 0 : i32
    %c0_i32_1 = arith.constant 0 : i32
    return %c0_i32, %c0_i32_0 : i32, i32
  }
  func.func @transform_5(%arg0: i32) -> (i32, i32) {
    %c0_i32 = arith.constant 0 : i32
    %c0_i32_0 = arith.constant 0 : i32
    %c0_i32_1 = arith.constant 0 : i32
    return %c0_i32, %c0_i32_0 : i32, i32
  }
  func.func @transform_6(%arg0: i32) -> (i32, i32) {
    %c0_i32 = arith.constant 0 : i32
    %c0_i32_0 = arith.constant 0 : i32
    %c0_i32_1 = arith.constant 0 : i32
    return %c0_i32, %c0_i32_0 : i32, i32
  }
  func.func @transform_7(%arg0: i32) -> (i32, i32) {
    %c0_i32 = arith.constant 0 : i32
    %c0_i32_0 = arith.constant 0 : i32
    %c0_i32_1 = arith.constant 0 : i32
    return %c0_i32, %c0_i32_0 : i32, i32
  }
  func.func @transform_8(%arg0: i32) -> (i32, i32) {
    %c0_i32 = arith.constant 0 : i32
    %c0_i32_0 = arith.constant 0 : i32
    %c0_i32_1 = arith.constant 0 : i32
    return %c0_i32, %c0_i32_0 : i32, i32
  }
  func.func @transform_9(%arg0: i32) -> (i32, i32) {
    %c0_i32 = arith.constant 0 : i32
    %c0_i32_0 = arith.constant 0 : i32
    %c0_i32_1 = arith.constant 0 : i32
    return %c0_i32, %c0_i32_0 : i32, i32
  }
  func.func @transform_10(%arg0: i32) -> (i32, i32) {
    %c0_i32 = arith.constant 0 : i32
    %c0_i32_0 = arith.constant 0 : i32
    %c0_i32_1 = arith.constant 0 : i32
    return %c0_i32, %c0_i32_0 : i32, i32
  }
  func.func @transform_11(%arg0: i32) -> (i32, i32) {
    %c0_i32 = arith.constant 0 : i32
    %c0_i32_0 = arith.constant 0 : i32
    return %arg0, %c0_i32 : i32, i32
  }
}

</mosaic_0001>

<llo_original>
// kernel: tpu_custom_call.1
$region0: #{tpu_custom_call.1}
  #allocation0 [shape = 'u32[]', space=smem, size = 0x4, offset = 0x4, fixed_abs, tag = 'smem constant byte address 0x4 - core index']
  #allocation1 [shape = 'u32[144,128]{1,0:T(1,128)}', space=vmem, size = 0x12000, scoped, tag = 'internal scratch']
  #allocation2 [shape = 'f32[1,1]{1,0:T(1,128)S(1)}', space=vmem, size = 0x200, scoped, tag = 'scoped memory for tpu_custom_call.1']
  %s0 = inlined_call_operand.hbm [shape: f32[6,8,32], index: 0, kind: input, shape index: {}]
  %s1 = inlined_call_operand.hbm [shape: f32[32,256], index: 1, kind: input, shape index: {}]
  %s2 = inlined_call_operand.vmem [shape: f32[1,256], index: 2, kind: input, shape index: {}]
  %s3 = inlined_call_operand.vmem [shape: f32[256,128], index: 3, kind: input, shape index: {}]
  %s4 = inlined_call_operand.vmem [shape: f32[1,128], index: 4, kind: input, shape index: {}]
  %s5 = inlined_call_operand.vmem [shape: f32[128,64], index: 5, kind: input, shape index: {}]
  %s6 = inlined_call_operand.vmem [shape: f32[1,64], index: 6, kind: input, shape index: {}]
  %s7 = inlined_call_operand.vmem [shape: f32[64,32], index: 7, kind: input, shape index: {}]
  %s8 = inlined_call_operand.vmem [shape: f32[1,32], index: 8, kind: input, shape index: {}]
  %s9 = inlined_call_operand.vmem [shape: f32[1,32], index: 9, kind: input, shape index: {}]
  %s10 = inlined_call_operand.<no memory space> [shape: f32[1,1], index: 10, kind: input, shape index: {}]
  %s11 = inlined_call_operand.hbm [shape: f32[1,6], index: 11, kind: output, shape index: {}]
  %s12 = sld [smem:[#allocation0]]
  $region62: #{tpu_custom_call.1} parent=0
    _
  %s14 = ssub.s32 1, %s12
  %s15 = scalar_select 0, %s14, %s12
  %v16 = vstv %s10
  %17 = vst [vmem:[#allocation2] sm:$0x1] %v16
  $region1: #{tpu_custom_call.1} parent=0
    #allocation3 [shape = 'u8[24576]{0}', space=vmem, size = 0x6000, scoped, tag = 'input window, operand 0, single buffered']
    #allocation4 [shape = 's32[1]{0}', space=sflag, size = 0x4, scoped, tag = 'scoped memory for tpu_custom_call.1']
    #allocation5 [shape = 's32[1]{0}', space=sflag, size = 0x4, scoped, tag = 'scoped memory for tpu_custom_call.1']
    #allocation6 [shape = 'u8[32768]{0}', space=vmem, size = 0x8000, scoped, tag = 'input window, operand 1, single buffered']
    #allocation7 [shape = 's32[1]{0}', space=sflag, size = 0x4, scoped, tag = 'scoped memory for tpu_custom_call.1']
    #allocation8 [shape = 'u8[512]{0}', space=vmem, size = 0x400, scoped, tag = 'output window, operand 0, single buffered']
    %18 = vsyncpa [#allocation4], 0
    %19 = vsyncpa [#allocation7], 0
    %20 = vsyncpa [#allocation5], 0
    // Predicated region
    $region2: #{tpu_custom_call.1} parent=1 // pred_check
      _
    $region3: #{tpu_custom_call.1} parent=1 // pred_check_branch
      %22 = sbr.rel (0) target = $region5
    $region4: #{tpu_custom_call.1} parent=1 // pred_region
      %s24 = ssub.s32 768, 768
      %25 = vsyncadd [#allocation4], %s24
      %s26 = sshll.u32 [#allocation3], 4
      %s27 = int_to_ptr.vmem [resolvable:$true] %s26
      %32 = dma.hbm_to_vmem [thread:$0]  %s0, 768, %s27, [#allocation4], 128, 128, 8
    $region5: #{tpu_custom_call.1} parent=1 // pred_fallthru
      _
    // Predicated region
    $region6: #{tpu_custom_call.1} parent=1 // pred_check
      _
    $region7: #{tpu_custom_call.1} parent=1 // pred_check_branch
      %34 = sbr.rel (0) target = $region9
    $region8: #{tpu_custom_call.1} parent=1 // pred_region
      %s36 = ssub.s32 1024, 1024
      %37 = vsyncadd [#allocation7], %s36
      %s38 = sshll.u32 [#allocation6], 4
      %s39 = int_to_ptr.vmem [resolvable:$true] %s38
      %44 = dma.hbm_to_vmem [thread:$0]  %s1, 1024, %s39, [#allocation7], 256, 256, 16
    $region9: #{tpu_custom_call.1} parent=1 // pred_fallthru
      _
    // Predicated region
    $region10: #{tpu_custom_call.1} parent=1 // pred_check
      _
    $region11: #{tpu_custom_call.1} parent=1 // pred_check_branch
      %46 = sbr.rel (0) target = $region13
    $region12: #{tpu_custom_call.1} parent=1 // pred_region
      _
    $region13: #{tpu_custom_call.1} parent=1 // pred_fallthru
      _
    // Predicated region
    $region14: #{tpu_custom_call.1} parent=1 // pred_check
      _
    $region15: #{tpu_custom_call.1} parent=1 // pred_check_branch
      %48 = sbr.rel (0) target = $region17
    $region16: #{tpu_custom_call.1} parent=1 // pred_region
      _
    $region17: #{tpu_custom_call.1} parent=1 // pred_fallthru
      _
    // Predicated region
    $region18: #{tpu_custom_call.1} parent=1 // pred_check
      _
    $region19: #{tpu_custom_call.1} parent=1 // pred_check_branch
      %50 = sbr.rel (0) target = $region21
    $region20: #{tpu_custom_call.1} parent=1 // pred_region
      _
    $region21: #{tpu_custom_call.1} parent=1 // pred_fallthru
      _
    // Predicated region
    $region22: #{tpu_custom_call.1} parent=1 // pred_check
      _
    $region23: #{tpu_custom_call.1} parent=1 // pred_check_branch
      %52 = sbr.rel (0) target = $region25
    $region24: #{tpu_custom_call.1} parent=1 // pred_region
      _
    $region25: #{tpu_custom_call.1} parent=1 // pred_fallthru
      _
    // Predicated region
    $region26: #{tpu_custom_call.1} parent=1 // pred_check
      _
    $region27: #{tpu_custom_call.1} parent=1 // pred_check_branch
      %54 = sbr.rel (0) target = $region29
    $region28: #{tpu_custom_call.1} parent=1 // pred_region
      _
    $region29: #{tpu_custom_call.1} parent=1 // pred_fallthru
      _
    // Predicated region
    $region30: #{tpu_custom_call.1} parent=1 // pred_check
      _
    $region31: #{tpu_custom_call.1} parent=1 // pred_check_branch
      %56 = sbr.rel (0) target = $region33
    $region32: #{tpu_custom_call.1} parent=1 // pred_region
      _
    $region33: #{tpu_custom_call.1} parent=1 // pred_fallthru
      _
    // Predicated region
    $region34: #{tpu_custom_call.1} parent=1 // pred_check
      _
    $region35: #{tpu_custom_call.1} parent=1 // pred_check_branch
      %58 = sbr.rel (0) target = $region37
    $region36: #{tpu_custom_call.1} parent=1 // pred_region
      _
    $region37: #{tpu_custom_call.1} parent=1 // pred_fallthru
      _
    // Predicated region
    $region38: #{tpu_custom_call.1} parent=1 // pred_check
      _
    $region39: #{tpu_custom_call.1} parent=1 // pred_check_branch
      %60 = sbr.rel (0) target = $region41
    $region40: #{tpu_custom_call.1} parent=1 // pred_region
      _
    $region41: #{tpu_custom_call.1} parent=1 // pred_fallthru
      _
    // Predicated region
    $region42: #{tpu_custom_call.1} parent=1 // pred_check
      _
    $region43: #{tpu_custom_call.1} parent=1 // pred_check_branch
      %62 = sbr.rel (0) target = $region45
    $region44: #{tpu_custom_call.1} parent=1 // pred_region
      _
    $region45: #{tpu_custom_call.1} parent=1 // pred_fallthru
      _
    // Predicated region
    $region46: #{tpu_custom_call.1} parent=1 // pred_check
      _
    $region47: #{tpu_custom_call.1} parent=1 // pred_check_branch
      %64 = sbr.rel (0) target = $region49
    $region48: #{tpu_custom_call.1} parent=1 // pred_region
      %65 = dma.done [#allocation4], 768
    $region49: #{tpu_custom_call.1} parent=1 // pred_fallthru
      _
    // Predicated region
    $region50: #{tpu_custom_call.1} parent=1 // pred_check
      _
    $region51: #{tpu_custom_call.1} parent=1 // pred_check_branch
      %67 = sbr.rel (0) target = $region53
    $region52: #{tpu_custom_call.1} parent=1 // pred_region
      %68 = dma.done [#allocation7], 1024
    $region53: #{tpu_custom_call.1} parent=1 // pred_fallthru
      _
    %v69 = vld [vmem:[#allocation3] sm:$0xff]
    %v70 = vld [vmem:[#allocation3 + $0x8] sm:$0xff]
    %v71 = vld [vmem:[#allocation3 + $0x10] sm:$0xff]
    %v72 = vld [vmem:[#allocation3 + $0x18] sm:$0xff]
    %v73 = vld [vmem:[#allocation3 + $0x20] sm:$0xff]
    %v74 = vld [vmem:[#allocation3 + $0x28] sm:$0xff]
    %v75 = vld [vmem:[#allocation6] sm:$0xff]
    %v76 = vld [vmem:[#allocation6 + $0x8] sm:$0xff]
    %v77 = vld [vmem:[#allocation6 + $0x10] sm:$0xff]
    %v78 = vld [vmem:[#allocation6 + $0x18] sm:$0xff]
    %v79 = vld [vmem:[#allocation6 + $0x20] sm:$0xff]
    %v80 = vld [vmem:[#allocation6 + $0x28] sm:$0xff]
    %v81 = vld [vmem:[#allocation6 + $0x30] sm:$0xff]
    %v82 = vld [vmem:[#allocation6 + $0x38] sm:$0xff]
    %v83 = vld [vmem:[%s2] sm:$0x3]
    %v85 = vlaneseq
    %v86 = vshrl.u32 %v85, 7
    %v87 = vsub.s32 0, %v86
    %v88 = vrot.slane %v83, %v87
    %v89 = vlaneseq
    %v90 = vshrl.u32 %v89, 7
    %v91 = vsub.s32 1, %v90
    %v92 = vrot.slane %v83, %v91
    %vm95 = vcmask 261120
    %v97 = vsel %vm95, %v69, 0
    %v100 = vsel %vm95, %v70, 0
    %v103 = vsel %vm95, %v71, 0
    %v106 = vsel %vm95, %v72, 0
    %v109 = vsel %vm95, %v73, 0
    %v112 = vsel %vm95, %v74, 0
    %114 = vmatprep.subr.mxu0 %v76
    %115 = vmatpush1.msra.mxu0 %v75
    %116 = vmatprep.subr.mxu0 %v78
    %117 = vmatpush1.msra.mxu0 %v77
    %118 = vmatprep.subr.mxu0 %v80
    %119 = vmatpush1.msra.mxu0 %v79
    %120 = vmatprep.subr.mxu0 %v82
    %121 = vmatpush1.msra.mxu0 %v81
    %122 = vmatprep.subr.mxu0 0.0
    %123 = vmatpush1.msra.mxu0 0.0
    %124 = vmatprep.subr.mxu0 0.0
    %125 = vmatpush1.msra.mxu0 0.0
    %126 = vmatprep.subr.mxu0 0.0
    %127 = vmatpush1.msra.mxu0 0.0
    %128 = vmatprep.subr.mxu0 0.0
    %129 = vmatpush1.msra.mxu0 0.0
    %130 = vmatprep.subr.mxu0 0.0
    %131 = vmatpush1.msra.mxu0 0.0
    %132 = vmatprep.subr.mxu0 0.0
    %133 = vmatpush1.msra.mxu0 0.0
    %134 = vmatprep.subr.mxu0 0.0
    %135 = vmatpush1.msra.mxu0 0.0
    %136 = vmatprep.subr.mxu0 0.0
    %137 = vmatpush1.msra.mxu0 0.0
    %138 = vmatprep.subr.mxu0 0.0
    %139 = vmatpush1.msra.mxu0 0.0
    %140 = vmatprep.subr.mxu0 0.0
    %141 = vmatpush1.msra.mxu0 0.0
    %142 = vmatprep.subr.mxu0 0.0
    %143 = vmatpush1.msra.mxu0 0.0
    %144 = vmatprep.subr.mxu0 0.0
    %145 = vmatpush1.msra.mxu0 0.0
    %146 = vmatprep.subr.mxu0 0.0
    %147 = vmatpush1.msra.mxu0 0.0
    %148 = vmatprep.subr.mxu0 0.0
    %149 = vmatpush1.msra.mxu0 0.0
    %150 = vmatprep.subr.mxu0 0.0
    %151 = vmatpush1.msra.mxu0 0.0
    %152 = vmatprep.subr.mxu0 0.0
    %153 = vmatpush1.msra.mxu0 0.0
    %154 = vmatprep.subr.mxu0 0.0
    %155 = vmatpush1.msra.mxu0 0.0
    %156 = vmatprep.subr.mxu0 0.0
    %157 = vmatpush1.msra.mxu0 0.0
    %158 = vmatprep.subr.mxu0 0.0
    %159 = vmatpush1.msra.mxu0 0.0
    %160 = vmatprep.subr.mxu0 0.0
    %161 = vmatpush1.msra.mxu0 0.0
    %162 = vmatprep.subr.mxu0 0.0
    %163 = vmatpush1.msra.mxu0 0.0
    %164 = vmatprep.subr.mxu0 0.0
    %165 = vmatpush1.msra.mxu0 0.0
    %166 = vmatprep.subr.mxu0 0.0
    %167 = vmatpush1.msra.mxu0 0.0
    %168 = vmatprep.subr.mxu0 0.0
    %169 = vmatpush1.msra.mxu0 0.0
    %170 = vmatprep.subr.mxu0 0.0
    %171 = vmatpush1.msra.mxu0 0.0
    %172 = vmatprep.subr.mxu0 0.0
    %173 = vmatpush1.msra.mxu0 0.0
    %174 = vmatprep.subr.mxu0 0.0
    %175 = vmatpush1.msra.mxu0 0.0
    %176 = vmatprep.subr.mxu0 0.0
    %177 = vmatpush1.msra.mxu0 0.0
    %178 = vmatprep.mubr.f32.mxu0 0.0
    %179 = vmatmul.mubr.f32.gmra.mrb[0].mxu0 %v97
    %v180 = vpop.f32.mrb[0].mxu0
    %v181 = vadd.f32 %v88, %v180
    %v182 = vpop.f32.mrb[0].mxu0
    %v183 = vadd.f32 %v92, %v182
    %184 = vmatprep.mubr.f32.mxu0 0.0
    %185 = vmatmul.mubr.f32.gmra.mrb[0].mxu0 %v100
    %v186 = vpop.f32.mrb[0].mxu0
    %v187 = vadd.f32 %v88, %v186
    %v188 = vpop.f32.mrb[0].mxu0
    %v189 = vadd.f32 %v92, %v188
    %190 = vmatprep.mubr.f32.mxu0 0.0
    %191 = vmatmul.mubr.f32.gmra.mrb[0].mxu0 %v103
    %v192 = vpop.f32.mrb[0].mxu0
    %v193 = vadd.f32 %v88, %v192
    %v194 = vpop.f32.mrb[0].mxu0
    %v195 = vadd.f32 %v92, %v194
    %196 = vmatprep.mubr.f32.mxu0 0.0
    %197 = vmatmul.mubr.f32.gmra.mrb[0].mxu0 %v106
    %v198 = vpop.f32.mrb[0].mxu0
    %v199 = vadd.f32 %v88, %v198
    %v200 = vpop.f32.mrb[0].mxu0
    %v201 = vadd.f32 %v92, %v200
    %202 = vmatprep.mubr.f32.mxu0 0.0
    %203 = vmatmul.mubr.f32.gmra.mrb[0].mxu0 %v109
    %v204 = vpop.f32.mrb[0].mxu0
    %v205 = vadd.f32 %v88, %v204
    %v206 = vpop.f32.mrb[0].mxu0
    %v207 = vadd.f32 %v92, %v206
    %208 = vmatprep.mubr.f32.mxu0 0.0
    %209 = vmatmul.mubr.f32.gmra.mrb[0].mxu0 %v112
    %v210 = vpop.f32.mrb[0].mxu0
    %v211 = vadd.f32 %v88, %v210
    %v212 = vpop.f32.mrb[0].mxu0
    %v213 = vadd.f32 %v92, %v212
    %214 = vdwg.mxu0
    %v215 = vmax.f32 %v181, 0.0
    %v216 = vmax.f32 %v183, 0.0
    %v217 = vmax.f32 %v187, 0.0
    %v218 = vmax.f32 %v189, 0.0
    %v219 = vmax.f32 %v193, 0.0
    %v220 = vmax.f32 %v195, 0.0
    %v221 = vmax.f32 %v199, 0.0
    %v222 = vmax.f32 %v201, 0.0
    %v223 = vmax.f32 %v205, 0.0
    %v224 = vmax.f32 %v207, 0.0
    %v225 = vmax.f32 %v211, 0.0
    %v226 = vmax.f32 %v213, 0.0
    %v227 = vld [vmem:[%s3] sm:$0xff]
    %v228 = vld [vmem:[%s3 + $0x8] sm:$0xff]
    %v229 = vld [vmem:[%s3 + $0x10] sm:$0xff]
    %v230 = vld [vmem:[%s3 + $0x18] sm:$0xff]
    %v231 = vld [vmem:[%s3 + $0x20] sm:$0xff]
    %v232 = vld [vmem:[%s3 + $0x28] sm:$0xff]
    %v233 = vld [vmem:[%s3 + $0x30] sm:$0xff]
    %v234 = vld [vmem:[%s3 + $0x38] sm:$0xff]
    %v235 = vld [vmem:[%s3 + $0x40] sm:$0xff]
    %v236 = vld [vmem:[%s3 + $0x48] sm:$0xff]
    %v237 = vld [vmem:[%s3 + $0x50] sm:$0xff]
    %v238 = vld [vmem:[%s3 + $0x58] sm:$0xff]
    %v239 = vld [vmem:[%s3 + $0x60] sm:$0xff]
    %v240 = vld [vmem:[%s3 + $0x68] sm:$0xff]
    %v241 = vld [vmem:[%s3 + $0x70] sm:$0xff]
    %v242 = vld [vmem:[%s3 + $0x78] sm:$0xff]
    %v243 = vld [vmem:[%s3 + $0x80] sm:$0xff]
    %v244 = vld [vmem:[%s3 + $0x88] sm:$0xff]
    %v245 = vld [vmem:[%s3 + $0x90] sm:$0xff]
    %v246 = vld [vmem:[%s3 + $0x98] sm:$0xff]
    %v247 = vld [vmem:[%s3 + $0xa0] sm:$0xff]
    %v248 = vld [vmem:[%s3 + $0xa8] sm:$0xff]
    %v249 = vld [vmem:[%s3 + $0xb0] sm:$0xff]
    %v250 = vld [vmem:[%s3 + $0xb8] sm:$0xff]
    %v251 = vld [vmem:[%s3 + $0xc0] sm:$0xff]
    %v252 = vld [vmem:[%s3 + $0xc8] sm:$0xff]
    %v253 = vld [vmem:[%s3 + $0xd0] sm:$0xff]
    %v254 = vld [vmem:[%s3 + $0xd8] sm:$0xff]
    %v255 = vld [vmem:[%s3 + $0xe0] sm:$0xff]
    %v256 = vld [vmem:[%s3 + $0xe8] sm:$0xff]
    %v257 = vld [vmem:[%s3 + $0xf0] sm:$0xff]
    %v258 = vld [vmem:[%s3 + $0xf8] sm:$0xff]
    %v259 = vld [vmem:[%s4] sm:$0x1]
    %v261 = vlaneseq
    %v262 = vshrl.u32 %v261, 7
    %v263 = vsub.s32 0, %v262
    %v264 = vrot.slane %v259, %v263
    %266 = vmatprep.subr.mxu0 0.0
    %267 = vmatpush1.msra.mxu0 %v227
    %268 = vmatprep.subr.mxu0 0.0
    %269 = vmatpush1.msra.mxu0 %v228
    %270 = vmatprep.subr.mxu0 0.0
    %271 = vmatpush1.msra.mxu0 %v229
    %272 = vmatprep.subr.mxu0 0.0
    %273 = vmatpush1.msra.mxu0 %v230
    %274 = vmatprep.subr.mxu0 0.0
    %275 = vmatpush1.msra.mxu0 %v231
    %276 = vmatprep.subr.mxu0 0.0
    %277 = vmatpush1.msra.mxu0 %v232
    %278 = vmatprep.subr.mxu0 0.0
    %279 = vmatpush1.msra.mxu0 %v233
    %280 = vmatprep.subr.mxu0 0.0
    %281 = vmatpush1.msra.mxu0 %v234
    %282 = vmatprep.subr.mxu0 0.0
    %283 = vmatpush1.msra.mxu0 %v235
    %284 = vmatprep.subr.mxu0 0.0
    %285 = vmatpush1.msra.mxu0 %v236
    %286 = vmatprep.subr.mxu0 0.0
    %287 = vmatpush1.msra.mxu0 %v237
    %288 = vmatprep.subr.mxu0 0.0
    %289 = vmatpush1.msra.mxu0 %v238
    %290 = vmatprep.subr.mxu0 0.0
    %291 = vmatpush1.msra.mxu0 %v239
    %292 = vmatprep.subr.mxu0 0.0
    %293 = vmatpush1.msra.mxu0 %v240
    %294 = vmatprep.subr.mxu0 0.0
    %295 = vmatpush1.msra.mxu0 %v241
    %296 = vmatprep.subr.mxu0 0.0
    %297 = vmatpush1.msra.mxu0 %v242
    %298 = vmatprep.subr.mxu0 0.0
    %299 = vmatpush1.msra.mxu0 %v243
    %300 = vmatprep.subr.mxu0 0.0
    %301 = vmatpush1.msra.mxu0 %v244
    %302 = vmatprep.subr.mxu0 0.0
    %303 = vmatpush1.msra.mxu0 %v245
    %304 = vmatprep.subr.mxu0 0.0
    %305 = vmatpush1.msra.mxu0 %v246
    %306 = vmatprep.subr.mxu0 0.0
    %307 = vmatpush1.msra.mxu0 %v247
    %308 = vmatprep.subr.mxu0 0.0
    %309 = vmatpush1.msra.mxu0 %v248
    %310 = vmatprep.subr.mxu0 0.0
    %311 = vmatpush1.msra.mxu0 %v249
    %312 = vmatprep.subr.mxu0 0.0
    %313 = vmatpush1.msra.mxu0 %v250
    %314 = vmatprep.subr.mxu0 0.0
    %315 = vmatpush1.msra.mxu0 %v251
    %316 = vmatprep.subr.mxu0 0.0
    %317 = vmatpush1.msra.mxu0 %v252
    %318 = vmatprep.subr.mxu0 0.0
    %319 = vmatpush1.msra.mxu0 %v253
    %320 = vmatprep.subr.mxu0 0.0
    %321 = vmatpush1.msra.mxu0 %v254
    %322 = vmatprep.subr.mxu0 0.0
    %323 = vmatpush1.msra.mxu0 %v255
    %324 = vmatprep.subr.mxu0 0.0
    %325 = vmatpush1.msra.mxu0 %v256
    %326 = vmatprep.subr.mxu0 0.0
    %327 = vmatpush1.msra.mxu0 %v257
    %328 = vmatprep.subr.mxu0 0.0
    %329 = vmatpush1.msra.mxu0 %v258
    %330 = vmatprep.mubr.f32.mxu0 %v216
    %331 = vmatmul.mubr.f32.gmra.mrb[0].mxu0 %v215
    %v332 = vpop.f32.mrb[0].mxu0
    %v333 = vadd.f32 %v264, %v332
    %v334 = vpop.f32.mrb[0].mxu0
    %335 = vmatprep.mubr.f32.mxu0 %v218
    %336 = vmatmul.mubr.f32.gmra.mrb[0].mxu0 %v217
    %v337 = vpop.f32.mrb[0].mxu0
    %v338 = vadd.f32 %v264, %v337
    %v339 = vpop.f32.mrb[0].mxu0
    %340 = vmatprep.mubr.f32.mxu0 %v220
    %341 = vmatmul.mubr.f32.gmra.mrb[0].mxu0 %v219
    %v342 = vpop.f32.mrb[0].mxu0
    %v343 = vadd.f32 %v264, %v342
    %v344 = vpop.f32.mrb[0].mxu0
    %345 = vmatprep.mubr.f32.mxu0 %v222
    %346 = vmatmul.mubr.f32.gmra.mrb[0].mxu0 %v221
    %v347 = vpop.f32.mrb[0].mxu0
    %v348 = vadd.f32 %v264, %v347
    %v349 = vpop.f32.mrb[0].mxu0
    %350 = vmatprep.mubr.f32.mxu0 %v224
    %351 = vmatmul.mubr.f32.gmra.mrb[0].mxu0 %v223
    %v352 = vpop.f32.mrb[0].mxu0
    %v353 = vadd.f32 %v264, %v352
    %v354 = vpop.f32.mrb[0].mxu0
    %355 = vmatprep.mubr.f32.mxu0 %v226
    %356 = vmatmul.mubr.f32.gmra.mrb[0].mxu0 %v225
    %v357 = vpop.f32.mrb[0].mxu0
    %v358 = vadd.f32 %v264, %v357
    %v359 = vpop.f32.mrb[0].mxu0
    %360 = vdwg.mxu0
    %v361 = vmax.f32 %v333, 0.0
    %v362 = vmax.f32 %v338, 0.0
    %v363 = vmax.f32 %v343, 0.0
    %v364 = vmax.f32 %v348, 0.0
    %v365 = vmax.f32 %v353, 0.0
    %v366 = vmax.f32 %v358, 0.0
    %v367 = vld [vmem:[%s5] sm:$0xff]
    %v368 = vld [vmem:[%s5 + $0x8] sm:$0xff]
    %v369 = vld [vmem:[%s5 + $0x10] sm:$0xff]
    %v370 = vld [vmem:[%s5 + $0x18] sm:$0xff]
    %v371 = vld [vmem:[%s5 + $0x20] sm:$0xff]
    %v372 = vld [vmem:[%s5 + $0x28] sm:$0xff]
    %v373 = vld [vmem:[%s5 + $0x30] sm:$0xff]
    %v374 = vld [vmem:[%s5 + $0x38] sm:$0xff]
    %v375 = vld [vmem:[%s5 + $0x40] sm:$0xff]
    %v376 = vld [vmem:[%s5 + $0x48] sm:$0xff]
    %v377 = vld [vmem:[%s5 + $0x50] sm:$0xff]
    %v378 = vld [vmem:[%s5 + $0x58] sm:$0xff]
    %v379 = vld [vmem:[%s5 + $0x60] sm:$0xff]
    %v380 = vld [vmem:[%s5 + $0x68] sm:$0xff]
    %v381 = vld [vmem:[%s5 + $0x70] sm:$0xff]
    %v382 = vld [vmem:[%s5 + $0x78] sm:$0xff]
    %v383 = vld [vmem:[%s6] sm:$0x1]
    %v385 = vlaneseq
    %v386 = vshrl.u32 %v385, 7
    %v387 = vsub.s32 0, %v386
    %v388 = vrot.slane %v383, %v387
    %390 = vmatprep.subr.mxu0 0.0
    %391 = vmatpush1.msra.mxu0 %v367
    %392 = vmatprep.subr.mxu0 0.0
    %393 = vmatpush1.msra.mxu0 %v368
    %394 = vmatprep.subr.mxu0 0.0
    %395 = vmatpush1.msra.mxu0 %v369
    %396 = vmatprep.subr.mxu0 0.0
    %397 = vmatpush1.msra.mxu0 %v370
    %398 = vmatprep.subr.mxu0 0.0
    %399 = vmatpush1.msra.mxu0 %v371
    %400 = vmatprep.subr.mxu0 0.0
    %401 = vmatpush1.msra.mxu0 %v372
    %402 = vmatprep.subr.mxu0 0.0
    %403 = vmatpush1.msra.mxu0 %v373
    %404 = vmatprep.subr.mxu0 0.0
    %405 = vmatpush1.msra.mxu0 %v374
    %406 = vmatprep.subr.mxu0 0.0
    %407 = vmatpush1.msra.mxu0 %v375
    %408 = vmatprep.subr.mxu0 0.0
    %409 = vmatpush1.msra.mxu0 %v376
    %410 = vmatprep.subr.mxu0 0.0
    %411 = vmatpush1.msra.mxu0 %v377
    %412 = vmatprep.subr.mxu0 0.0
    %413 = vmatpush1.msra.mxu0 %v378
    %414 = vmatprep.subr.mxu0 0.0
    %415 = vmatpush1.msra.mxu0 %v379
    %416 = vmatprep.subr.mxu0 0.0
    %417 = vmatpush1.msra.mxu0 %v380
    %418 = vmatprep.subr.mxu0 0.0
    %419 = vmatpush1.msra.mxu0 %v381
    %420 = vmatprep.subr.mxu0 0.0
    %421 = vmatpush1.msra.mxu0 %v382
    %422 = vmatprep.subr.mxu0 0.0
    %423 = vmatpush1.msra.mxu0 0.0
    %424 = vmatprep.subr.mxu0 0.0
    %425 = vmatpush1.msra.mxu0 0.0
    %426 = vmatprep.subr.mxu0 0.0
    %427 = vmatpush1.msra.mxu0 0.0
    %428 = vmatprep.subr.mxu0 0.0
    %429 = vmatpush1.msra.mxu0 0.0
    %430 = vmatprep.subr.mxu0 0.0
    %431 = vmatpush1.msra.mxu0 0.0
    %432 = vmatprep.subr.mxu0 0.0
    %433 = vmatpush1.msra.mxu0 0.0
    %434 = vmatprep.subr.mxu0 0.0
    %435 = vmatpush1.msra.mxu0 0.0
    %436 = vmatprep.subr.mxu0 0.0
    %437 = vmatpush1.msra.mxu0 0.0
    %438 = vmatprep.subr.mxu0 0.0
    %439 = vmatpush1.msra.mxu0 0.0
    %440 = vmatprep.subr.mxu0 0.0
    %441 = vmatpush1.msra.mxu0 0.0
    %442 = vmatprep.subr.mxu0 0.0
    %443 = vmatpush1.msra.mxu0 0.0
    %444 = vmatprep.subr.mxu0 0.0
    %445 = vmatpush1.msra.mxu0 0.0
    %446 = vmatprep.subr.mxu0 0.0
    %447 = vmatpush1.msra.mxu0 0.0
    %448 = vmatprep.subr.mxu0 0.0
    %449 = vmatpush1.msra.mxu0 0.0
    %450 = vmatprep.subr.mxu0 0.0
    %451 = vmatpush1.msra.mxu0 0.0
    %452 = vmatprep.subr.mxu0 0.0
    %453 = vmatpush1.msra.mxu0 0.0
    %454 = vmatprep.mubr.f32.mxu0 0.0
    %455 = vmatmul.mubr.f32.gmra.mrb[0].mxu0 %v361
    %v456 = vpop.f32.mrb[0].mxu0
    %v457 = vadd.f32 %v388, %v456
    %v458 = vpop.f32.mrb[0].mxu0
    %459 = vmatprep.mubr.f32.mxu0 0.0
    %460 = vmatmul.mubr.f32.gmra.mrb[0].mxu0 %v362
    %v461 = vpop.f32.mrb[0].mxu0
    %v462 = vadd.f32 %v388, %v461
    %v463 = vpop.f32.mrb[0].mxu0
    %464 = vmatprep.mubr.f32.mxu0 0.0
    %465 = vmatmul.mubr.f32.gmra.mrb[0].mxu0 %v363
    %v466 = vpop.f32.mrb[0].mxu0
    %v467 = vadd.f32 %v388, %v466
    %v468 = vpop.f32.mrb[0].mxu0
    %469 = vmatprep.mubr.f32.mxu0 0.0
    %470 = vmatmul.mubr.f32.gmra.mrb[0].mxu0 %v364
    %v471 = vpop.f32.mrb[0].mxu0
    %v472 = vadd.f32 %v388, %v471
    %v473 = vpop.f32.mrb[0].mxu0
    %474 = vmatprep.mubr.f32.mxu0 0.0
    %475 = vmatmul.mubr.f32.gmra.mrb[0].mxu0 %v365
    %v476 = vpop.f32.mrb[0].mxu0
    %v477 = vadd.f32 %v388, %v476
    %v478 = vpop.f32.mrb[0].mxu0
    %479 = vmatprep.mubr.f32.mxu0 0.0
    %480 = vmatmul.mubr.f32.gmra.mrb[0].mxu0 %v366
    %v481 = vpop.f32.mrb[0].mxu0
    %v482 = vadd.f32 %v388, %v481
    %v483 = vpop.f32.mrb[0].mxu0
    %484 = vdwg.mxu0
    %vm485 = vcmask 523264
    %v486 = vsel %vm485, %v457, 0.0
    %v487 = vrot.slane %v486, 4
    %v488 = vadd.f32 %v486, %v487
    %v489 = vrot.slane %v488, 2
    %v490 = vadd.f32 %v488, %v489
    %v491 = vrot.slane %v490, 1
    %v492 = vadd.f32 %v490, %v491
    %v493 = vsel %vm485, %v462, 0.0
    %v494 = vrot.slane %v493, 4
    %v495 = vadd.f32 %v493, %v494
    %v496 = vrot.slane %v495, 2
    %v497 = vadd.f32 %v495, %v496
    %v498 = vrot.slane %v497, 1
    %v499 = vadd.f32 %v497, %v498
    %v500 = vsel %vm485, %v467, 0.0
    %v501 = vrot.slane %v500, 4
    %v502 = vadd.f32 %v500, %v501
    %v503 = vrot.slane %v502, 2
    %v504 = vadd.f32 %v502, %v503
    %v505 = vrot.slane %v504, 1
    %v506 = vadd.f32 %v504, %v505
    %v507 = vsel %vm485, %v472, 0.0
    %v508 = vrot.slane %v507, 4
    %v509 = vadd.f32 %v507, %v508
    %v510 = vrot.slane %v509, 2
    %v511 = vadd.f32 %v509, %v510
    %v512 = vrot.slane %v511, 1
    %v513 = vadd.f32 %v511, %v512
    %v514 = vsel %vm485, %v477, 0.0
    %v515 = vrot.slane %v514, 4
    %v516 = vadd.f32 %v514, %v515
    %v517 = vrot.slane %v516, 2
    %v518 = vadd.f32 %v516, %v517
    %v519 = vrot.slane %v518, 1
    %v520 = vadd.f32 %v518, %v519
    %v521 = vsel %vm485, %v482, 0.0
    %v522 = vrot.slane %v521, 4
    %v523 = vadd.f32 %v521, %v522
    %v524 = vrot.slane %v523, 2
    %v525 = vadd.f32 %v523, %v524
    %v526 = vrot.slane %v525, 1
    %v527 = vadd.f32 %v525, %v526
    %v528 = vrcp.pop 8.0
    %v529 = vmul.f32 %v492, %v528
    %v530 = vmul.f32 %v499, %v528
    %v531 = vmul.f32 %v506, %v528
    %v532 = vmul.f32 %v513, %v528
    %v533 = vmul.f32 %v520, %v528
    %v534 = vmul.f32 %v527, %v528
    %v535 = vld [vmem:[%s7] sm:$0xff]
    %v536 = vld [vmem:[%s7 + $0x8] sm:$0xff]
    %v537 = vld [vmem:[%s7 + $0x10] sm:$0xff]
    %v538 = vld [vmem:[%s7 + $0x18] sm:$0xff]
    %v539 = vld [vmem:[%s7 + $0x20] sm:$0xff]
    %v540 = vld [vmem:[%s7 + $0x28] sm:$0xff]
    %v541 = vld [vmem:[%s7 + $0x30] sm:$0xff]
    %v542 = vld [vmem:[%s7 + $0x38] sm:$0xff]
    %v543 = vld [vmem:[%s8] sm:$0x1]
    %v545 = vlaneseq
    %v546 = vshrl.u32 %v545, 7
    %v547 = vsub.s32 0, %v546
    %v548 = vrot.slane %v543, %v547
    %vm556 = vcmask 1041409
    %v557 = vsel %vm556, %v530, %v529
    %vm558 = vcmask 1042434
    %v559 = vsel %vm558, %v531, %v557
    %vm560 = vcmask 1043459
    %v561 = vsel %vm560, %v532, %v559
    %vm562 = vcmask 1044484
    %v563 = vsel %vm562, %v533, %v561
    %vm564 = vcmask 1045509
    %v565 = vsel %vm564, %v534, %v563
    %v566 = vsel %vm485, %v565, 0
    %568 = vmatprep.subr.mxu0 0.0
    %569 = vmatpush1.msra.mxu0 %v535
    %570 = vmatprep.subr.mxu0 0.0
    %571 = vmatpush1.msra.mxu0 %v536
    %572 = vmatprep.subr.mxu0 0.0
    %573 = vmatpush1.msra.mxu0 %v537
    %574 = vmatprep.subr.mxu0 0.0
    %575 = vmatpush1.msra.mxu0 %v538
    %576 = vmatprep.subr.mxu0 0.0
    %577 = vmatpush1.msra.mxu0 %v539
    %578 = vmatprep.subr.mxu0 0.0
    %579 = vmatpush1.msra.mxu0 %v540
    %580 = vmatprep.subr.mxu0 0.0
    %581 = vmatpush1.msra.mxu0 %v541
    %582 = vmatprep.subr.mxu0 0.0
    %583 = vmatpush1.msra.mxu0 %v542
    %584 = vmatprep.subr.mxu0 0.0
    %585 = vmatpush1.msra.mxu0 0.0
    %586 = vmatprep.subr.mxu0 0.0
    %587 = vmatpush1.msra.mxu0 0.0
    %588 = vmatprep.subr.mxu0 0.0
    %589 = vmatpush1.msra.mxu0 0.0
    %590 = vmatprep.subr.mxu0 0.0
    %591 = vmatpush1.msra.mxu0 0.0
    %592 = vmatprep.subr.mxu0 0.0
    %593 = vmatpush1.msra.mxu0 0.0
    %594 = vmatprep.subr.mxu0 0.0
    %595 = vmatpush1.msra.mxu0 0.0
    %596 = vmatprep.subr.mxu0 0.0
    %597 = vmatpush1.msra.mxu0 0.0
    %598 = vmatprep.subr.mxu0 0.0
    %599 = vmatpush1.msra.mxu0 0.0
    %600 = vmatprep.subr.mxu0 0.0
    %601 = vmatpush1.msra.mxu0 0.0
    %602 = vmatprep.subr.mxu0 0.0
    %603 = vmatpush1.msra.mxu0 0.0
    %604 = vmatprep.subr.mxu0 0.0
    %605 = vmatpush1.msra.mxu0 0.0
    %606 = vmatprep.subr.mxu0 0.0
    %607 = vmatpush1.msra.mxu0 0.0
    %608 = vmatprep.subr.mxu0 0.0
    %609 = vmatpush1.msra.mxu0 0.0
    %610 = vmatprep.subr.mxu0 0.0
    %611 = vmatpush1.msra.mxu0 0.0
    %612 = vmatprep.subr.mxu0 0.0
    %613 = vmatpush1.msra.mxu0 0.0
    %614 = vmatprep.subr.mxu0 0.0
    %615 = vmatpush1.msra.mxu0 0.0
    %616 = vmatprep.subr.mxu0 0.0
    %617 = vmatpush1.msra.mxu0 0.0
    %618 = vmatprep.subr.mxu0 0.0
    %619 = vmatpush1.msra.mxu0 0.0
    %620 = vmatprep.subr.mxu0 0.0
    %621 = vmatpush1.msra.mxu0 0.0
    %622 = vmatprep.subr.mxu0 0.0
    %623 = vmatpush1.msra.mxu0 0.0
    %624 = vmatprep.subr.mxu0 0.0
    %625 = vmatpush1.msra.mxu0 0.0
    %626 = vmatprep.subr.mxu0 0.0
    %627 = vmatpush1.msra.mxu0 0.0
    %628 = vmatprep.subr.mxu0 0.0
    %629 = vmatpush1.msra.mxu0 0.0
    %630 = vmatprep.subr.mxu0 0.0
    %631 = vmatpush1.msra.mxu0 0.0
    %632 = vmatprep.mubr.f32.mxu0 0.0
    %633 = vmatmul.mubr.f32.gmra.mrb[0].mxu0 %v566
    %v634 = vpop.f32.mrb[0].mxu0
    %v635 = vadd.f32 %v548, %v634
    %v636 = vpop.f32.mrb[0].mxu0
    %637 = vdwg.mxu0
    %v638 = vmax.f32 %v635, 0.0
    %v639 = vld [vmem:[%s9] sm:$0x1]
    %v641 = vlaneseq
    %v642 = vshrl.u32 %v641, 7
    %v643 = vsub.s32 0, %v642
    %v644 = vrot.slane %v639, %v643
    %v646 = vmul.f32 %v638, %v644
    %vm647 = vcmask 259072
    %v648 = vsel %vm647, %v646, 0.0
    %649 = vadd.xlane.f32.xlu0 %v648
    %v650 = vpop.xlane.xlu0 %649
    %v651 = vld [vmem:[#allocation2] sm:$0x1]
    %v653 = vlaneseq
    %v654 = vshrl.u32 %v653, 7
    %v655 = vsub.s32 0, %v654
    %v656 = vrot.slane %v651, %v655
    %v658 = vadd.f32 %v650, %v656
    %v659 = vxor.u32 %v658, 2147483648
    %v660 = vmul.f32 %v659, 1.442695
    %v661 = vpow.pop %v660
    %v662 = vadd.f32 %v661, 1.0
    %v663 = vrcp.pop %v662
    %v664 = vmul.f32 1.0, %v663
    %666 = vset.pattern.permute.xlu0 0
    %667 = vperm.xlu0 %666, %v664
    %v668 = vpop.permute.xlu0 %667
    %v669 = vlaneseq
    %v670 = vand.u32 %v669, 127
    %v671 = vlaneseq
    %v672 = vshrl.u32 %v671, 7
    %v673 = vsub.s32 %v670, %v672
    %v674 = vrot.slane %v668, %v673
    %vm676 = vcmask 40960
    %677 = vst.msk [vmem:[#allocation8] sm:$0x1] %vm676, %v674
    // Predicated region
    $region54: #{tpu_custom_call.1} parent=1 // pred_check
      _
    $region55: #{tpu_custom_call.1} parent=1 // pred_check_branch
      %679 = sbr.rel (0) target = $region57
    $region56: #{tpu_custom_call.1} parent=1 // pred_region
      %s681 = ssub.s32 16, 16
      %682 = vsyncadd [#allocation5], %s681
      %s684 = sshll.u32 [#allocation8], 4
      %s685 = int_to_ptr.vmem [resolvable:$true] %s684
      %687 = dma.vmem_to_hbm [thread:$0]  %s685, 16, %s11, [#allocation5]
    $region57: #{tpu_custom_call.1} parent=1 // pred_fallthru
      _
    // Predicated region
    $region58: #{tpu_custom_call.1} parent=1 // pred_check
      _
    $region59: #{tpu_custom_call.1} parent=1 // pred_check_branch
      %689 = sbr.rel (0) target = $region61
    $region60: #{tpu_custom_call.1} parent=1 // pred_region
      %690 = dma.done [#allocation5], 16
    $region61: #{tpu_custom_call.1} parent=1 // pred_fallthru
      _
    %691 = vsyncpa [#allocation4], 1
    %692 = vsyncpa [#allocation7], 1
    %693 = vsyncpa [#allocation5], 1

</llo_original>
